<compile_context>
chip_gen: v5e
topology: v5e:2x2
jax: 0.10.0
libtpu: 0.0.40
codegen_flags: <defaults>
</compile_context>

<pallas_src>
import numpy as np
import jax
import jax.numpy as jnp
from jax.experimental import pallas as pl
from jax.experimental.pallas import tpu as pltpu


def _largest_divisor_leq(n, target):
    t = max(1, min(int(n), int(target)))
    for d in range(t, 0, -1):
        if n % d == 0:
            return d
    return 1


def _conv_bn_act_kernel(x_ref, w_ref, scale_ref, bias_ref, o_ref):
    # x_ref:     (1, tH, Wout, K)   im2col-packed activation tile
    # w_ref:     (K, tC)            packed weights for this Cout tile
    # scale_ref: (1, tC)            folded BN scale (f32)
    # bias_ref:  (1, tC)            folded BN bias  (f32)
    # o_ref:     (1, tH, Wout, tC)
    _, tH, Wout, K = x_ref.shape
    tC = o_ref.shape[3]

    # Single lane-dense MXU matmul: (tH*Wout, K) @ (K, tC) -> f32 accumulate.
    x2d = x_ref[...].reshape(tH * Wout, K)
    acc = jnp.dot(x2d, w_ref[...], preferred_element_type=jnp.float32)

    # Folded BatchNorm (per-output-channel affine) + SiLU in f32, then store.
    y = acc * scale_ref[...] + bias_ref[...]
    y = y * jax.nn.sigmoid(y)
    o_ref[...] = y.reshape(1, tH, Wout, tC).astype(o_ref.dtype)


def conv_bn_act(x_nchw, weight_oihw, bn_gamma, bn_beta, bn_mean, bn_var,
                *, stride=1, eps=1e-5, compute_dtype=jnp.float32,
                tile_h=None, tile_cout=None):
    """ConvBNAct forward. x: NCHW, weight: (Cout, Cin, KH, KW). Returns NCHW."""
    N, Cin, H, W = x_nchw.shape
    Cout, Cin_w, KH, KW = weight_oihw.shape
    assert Cin == Cin_w, "groups != 1 not supported"
    pad = (KH - 1) // 2
    s = int(stride)
    Hout = (H + 2 * pad - KH) // s + 1
    Wout = (W + 2 * pad - KW) // s + 1
    K = KH * KW * Cin

    # ---- layout plumbing (one fused XLA pass): NCHW -> padded NHWC ->
    # im2col packing of the KH*KW taps into the contraction axis.
    x_nhwc = jnp.transpose(x_nchw, (0, 2, 3, 1))
    x_pad = jnp.pad(x_nhwc, ((0, 0), (pad, pad), (pad, pad), (0, 0)))
    cols = []
    for di in range(KH):
        for dj in range(KW):
            cols.append(x_pad[:, di:di + s * (Hout - 1) + 1:s,
                              dj:dj + s * (Wout - 1) + 1:s, :])
    x_packed = jnp.concatenate(cols, axis=-1).astype(compute_dtype)

    # (Cout, Cin, KH, KW) -> (KH, KW, Cin, Cout) -> (K, Cout); tap ordering
    # matches the im2col packing above (di major, dj, then c).
    w_packed = jnp.transpose(weight_oihw, (2, 3, 1, 0)).reshape(K, Cout)
    w_packed = w_packed.astype(compute_dtype)

    # Fold BN into per-channel scale / bias (inference form), kept in f32.
    scale = (bn_gamma / jnp.sqrt(bn_var + eps)).astype(jnp.float32)
    bias = (bn_beta - bn_mean * scale).astype(jnp.float32)
    scale = scale.reshape(1, Cout)
    bias = bias.reshape(1, Cout)

    # ---- tile selection --------------------------------------------------
    # Cout tile: full Cout if modest, else a 128-multiple divisor (256-wide
    # tiles feed v6e/v7x's 2x256^2 MXUs; 128 still fine on v5e).
    if tile_cout is not None:
        tC = int(tile_cout)
    elif Cout <= 512:
        tC = Cout
    else:
        tC = Cout
        for cand in (512, 256, 128):
            if Cout % cand == 0:
                tC = cand
                break
    assert Cout % tC == 0 and (tC == Cout or tC % 128 == 0)

    # H tile: largest divisor of Hout keeping the double-buffered working set
    # under ~12 MiB (fits v5e's 16 MiB scoped default; v6e/v7x have 32 MiB).
    in_bytes = np.dtype(compute_dtype).itemsize
    per_row = Wout * (K * in_bytes * 2 + tC * 4 * 2)   # x + out, double-buffered
    w_bytes = K * tC * in_bytes * 2
    budget = 12 * 1024 * 1024
    th_cap = max(1, (budget - w_bytes) // max(1, per_row))
    if tile_h is not None:
        tH = int(tile_h)
        assert Hout % tH == 0
    else:
        tH = _largest_divisor_leq(Hout, min(th_cap, 64))

    grid = (N, Hout // tH, Cout // tC)

    flops = 2 * N * Hout * Wout * K * Cout
    bytes_accessed = (int(x_packed.size) * in_bytes
                      + int(w_packed.size) * in_bytes
                      + (int(scale.size) + int(bias.size)) * 4
                      + N * Hout * Wout * Cout * 4)
    cost = pl.CostEstimate(flops=flops,
                           transcendentals=N * Hout * Wout * Cout,
                           bytes_accessed=bytes_accessed)

    out_nhwc = pl.pallas_call(
        _conv_bn_act_kernel,
        out_shape=jax.ShapeDtypeStruct((N, Hout, Wout, Cout), jnp.float32),
        grid_spec=pltpu.PrefetchScalarGridSpec(
            num_scalar_prefetch=0,
            grid=grid,
            in_specs=[
                pl.BlockSpec((1, tH, Wout, K), lambda n, h, c: (n, h, 0, 0)),
                pl.BlockSpec((K, tC),          lambda n, h, c: (0, c)),
                pl.BlockSpec((1, tC),          lambda n, h, c: (0, c)),
                pl.BlockSpec((1, tC),          lambda n, h, c: (0, c)),
            ],
            out_specs=pl.BlockSpec((1, tH, Wout, tC),
                                   lambda n, h, c: (n, h, 0, c)),
        ),
        compiler_params=pltpu.CompilerParams(
            dimension_semantics=("parallel", "parallel", "parallel"),
            vmem_limit_bytes=32 * 1024 * 1024),
        cost_estimate=cost,
    )(x_packed, w_packed, scale, bias)

    # NHWC -> NCHW to match the PyTorch module's convention.
    # (If the surrounding model can consume NHWC, drop this transpose.)
    return jnp.transpose(out_nhwc, (0, 3, 1, 2))


def _reference(x_nchw, weight_oihw, gamma, beta, mean, var, stride=1, eps=1e-5):
    pad = (weight_oihw.shape[2] - 1) // 2
    y = jax.lax.conv_general_dilated(
        x_nchw, weight_oihw, window_strides=(stride, stride),
        padding=[(pad, pad), (pad, pad)],
        dimension_numbers=('NCHW', 'OIHW', 'NCHW'))
    scale = gamma / jnp.sqrt(var + eps)
    bias = beta - mean * scale
    y = y * scale[None, :, None, None] + bias[None, :, None, None]
    return y * jax.nn.sigmoid(y)


if __name__ == "__main__":
    key = jax.random.PRNGKey(0)
    k_x, k_w, k_g, k_b, k_m, k_v = jax.random.split(key, 6)

    N, Cin, H, W = 2, 4, 16, 16
    Cout, KH, KW = 8, 3, 3

    x = jax.random.normal(k_x, (N, Cin, H, W), jnp.float32)
    weight = jax.random.normal(k_w, (Cout, Cin, KH, KW), jnp.float32) * 0.1
    gamma = jax.random.normal(k_g, (Cout,), jnp.float32) * 0.1 + 1.0
    beta = jax.random.normal(k_b, (Cout,), jnp.float32) * 0.1
    mean = jax.random.normal(k_m, (Cout,), jnp.float32) * 0.1
    var = jax.random.uniform(k_v, (Cout,), jnp.float32, 0.5, 1.5)

    ref = jax.block_until_ready(_reference(x, weight, gamma, beta, mean, var))

    # f32, default tile heuristic.
    out = jax.block_until_ready(conv_bn_act(x, weight, gamma, beta, mean, var))
    assert out.shape == (N, Cout, H, W)
    assert np.allclose(np.asarray(out), np.asarray(ref), atol=1e-4, rtol=1e-4)

    # f32, forced multi-tile grid (exercises the H-tiling index maps).
    out_tiled = jax.block_until_ready(
        conv_bn_act(x, weight, gamma, beta, mean, var, tile_h=8))
    assert np.allclose(np.asarray(out_tiled), np.asarray(ref),
                       atol=1e-4, rtol=1e-4)

    # bf16 compute path (MXU-native on v6e/v7x); f32 accumulate + f32 output.
    out_bf16 = jax.block_until_ready(
        conv_bn_act(x, weight, gamma, beta, mean, var,
                    compute_dtype=jnp.bfloat16, tile_h=8))
    assert np.allclose(np.asarray(out_bf16), np.asarray(ref),
                       atol=5e-2, rtol=5e-2)

    print("KERNEL_OK")
</pallas_src>

<mosaic_0001>
module attributes {stable_mosaic.version = 11 : i64} {
  func.func @_conv_bn_act_kernel(%arg0: i32, %arg1: i32, %arg2: i32, %arg3: memref<1x16x16x36xf32, #tpu.memory_space<vmem>>, %arg4: memref<36x8xf32, #tpu.memory_space<vmem>>, %arg5: memref<1x8xf32, #tpu.memory_space<vmem>>, %arg6: memref<1x8xf32, #tpu.memory_space<vmem>>, %arg7: memref<1x16x16x8xf32, #tpu.memory_space<vmem>>) attributes {dimension_semantics = [#tpu.dimension_semantics<parallel>, #tpu.dimension_semantics<parallel>, #tpu.dimension_semantics<parallel>], iteration_bounds = array<i64: 2, 1, 1>, scalar_prefetch = 0 : i64, scratch_operands = 0 : i64, tpu.core_type = #tpu.core_type<tc>, window_params = [{transform_indices = @transform_0, window_bounds = array<i64: 1, 16, 16, 36>}, {transform_indices = @transform_1, window_bounds = array<i64: 36, 8>}, {transform_indices = @transform_2, window_bounds = array<i64: 1, 8>}, {transform_indices = @transform_3, window_bounds = array<i64: 1, 8>}, {transform_indices = @transform_4, window_bounds = array<i64: 1, 16, 16, 8>}]} {
    %c0 = arith.constant 0 : index
    %c0_0 = arith.constant 0 : index
    %c0_1 = arith.constant 0 : index
    %c0_2 = arith.constant 0 : index
    %0 = vector.load %arg3[%c0, %c0_0, %c0_1, %c0_2] : memref<1x16x16x36xf32, #tpu.memory_space<vmem>>, vector<1x16x16x36xf32>
    %1 = vector.shape_cast %0 : vector<1x16x16x36xf32> to vector<256x36xf32>
    %c0_3 = arith.constant 0 : index
    %c0_4 = arith.constant 0 : index
    %2 = vector.load %arg4[%c0_3, %c0_4] : memref<36x8xf32, #tpu.memory_space<vmem>>, vector<36x8xf32>
    %cst = arith.constant dense<0.000000e+00> : vector<256x8xf32>
    %3 = tpu.matmul %1, %2, %cst {dimension_numbers = #tpu.dot_dimension_numbers<[1], [0], [0], [1], [0, 0, 1, 1], [], []>} : vector<256x36xf32>, vector<36x8xf32>, vector<256x8xf32> -> vector<256x8xf32>
    %c0_5 = arith.constant 0 : index
    %c0_6 = arith.constant 0 : index
    %4 = vector.load %arg5[%c0_5, %c0_6] : memref<1x8xf32, #tpu.memory_space<vmem>>, vector<1x8xf32>
    %5 = vector.broadcast %4 : vector<1x8xf32> to vector<256x8xf32>
    %6 = arith.mulf %3, %5 : vector<256x8xf32>
    %c0_7 = arith.constant 0 : index
    %c0_8 = arith.constant 0 : index
    %7 = vector.load %arg6[%c0_7, %c0_8] : memref<1x8xf32, #tpu.memory_space<vmem>>, vector<1x8xf32>
    %8 = vector.broadcast %7 : vector<1x8xf32> to vector<256x8xf32>
    %9 = arith.addf %6, %8 : vector<256x8xf32>
    %10 = arith.negf %9 : vector<256x8xf32>
    %11 = math.exp %10 : vector<256x8xf32>
    %cst_9 = arith.constant 1.000000e+00 : f32
    %12 = vector.broadcast %cst_9 : f32 to vector<256x8xf32>
    %13 = arith.addf %12, %11 : vector<256x8xf32>
    %14 = arith.divf %12, %13 : vector<256x8xf32>
    %15 = arith.mulf %9, %14 : vector<256x8xf32>
    %16 = vector.shape_cast %15 : vector<256x8xf32> to vector<1x16x16x8xf32>
    %c0_10 = arith.constant 0 : index
    %c0_11 = arith.constant 0 : index
    %c0_12 = arith.constant 0 : index
    %c0_13 = arith.constant 0 : index
    %17 = vector.load %arg7[%c0_10, %c0_11, %c0_12, %c0_13] : memref<1x16x16x8xf32, #tpu.memory_space<vmem>>, vector<1x16x16x8xf32>
    tpu.vector_store %arg7[%c0_10, %c0_11, %c0_12, %c0_13], %16 {strides = array<i32>} : memref<1x16x16x8xf32, #tpu.memory_space<vmem>>, vector<1x16x16x8xf32>,
    return
  }
  func.func @transform_0(%arg0: i32, %arg1: i32, %arg2: i32) -> (i32, i32, i32, i32) {
    %c0_i32 = arith.constant 0 : i32
    %c0_i32_0 = arith.constant 0 : i32
    %c0_i32_1 = arith.constant 0 : i32
    return %arg0, %arg1, %c0_i32, %c0_i32_0 : i32, i32, i32, i32
  }
  func.func @transform_1(%arg0: i32, %arg1: i32, %arg2: i32) -> (i32, i32) {
    %c0_i32 = arith.constant 0 : i32
    %c0_i32_0 = arith.constant 0 : i32
    return %c0_i32, %arg2 : i32, i32
  }
  func.func @transform_2(%arg0: i32, %arg1: i32, %arg2: i32) -> (i32, i32) {
    %c0_i32 = arith.constant 0 : i32
    %c0_i32_0 = arith.constant 0 : i32
    return %c0_i32, %arg2 : i32, i32
  }
  func.func @transform_3(%arg0: i32, %arg1: i32, %arg2: i32) -> (i32, i32) {
    %c0_i32 = arith.constant 0 : i32
    %c0_i32_0 = arith.constant 0 : i32
    return %c0_i32, %arg2 : i32, i32
  }
  func.func @transform_4(%arg0: i32, %arg1: i32, %arg2: i32) -> (i32, i32, i32, i32) {
    %c0_i32 = arith.constant 0 : i32
    %c0_i32_0 = arith.constant 0 : i32
    return %arg0, %arg1, %c0_i32, %arg2 : i32, i32, i32, i32
  }
}

</mosaic_0001>

<llo_original>
// kernel: tpu_custom_call.1
$region0: #{tpu_custom_call.1}
  #allocation0 [shape = 'u32[]', space=smem, size = 0x4, offset = 0x4, fixed_abs, tag = 'smem constant byte address 0x4 - core index']
  #allocation1 [shape = 'u32[72,128]{1,0:T(1,128)}', space=vmem, size = 0x9000, scoped, tag = 'internal scratch']
  %s0 = inlined_call_operand.hbm [shape: f32[2,16,16,36], index: 0, kind: input, shape index: {}]
  %s1 = inlined_call_operand.vmem [shape: f32[36,8], index: 1, kind: input, shape index: {}]
  %s2 = inlined_call_operand.vmem [shape: f32[1,8], index: 2, kind: input, shape index: {}]
  %s3 = inlined_call_operand.vmem [shape: f32[1,8], index: 3, kind: input, shape index: {}]
  %s4 = inlined_call_operand.vmem [shape: f32[2,16,16,8], index: 4, kind: output, shape index: {}]
  %s5 = sld [smem:[#allocation0]]
  $region53: #{tpu_custom_call.1} parent=0
    _
  %s7 = ssub.s32 1, %s5
  %s8 = scalar_select 0, %s7, %s5
  $region1: #{tpu_custom_call.1} parent=0
    #allocation2 [shape = 'u8[262144]{0}', space=vmem, size = 0x40000, scoped, tag = 'input window, operand 0']
    #allocation3 [shape = 's32[2]{0}', space=sflag, size = 0x8, scoped, tag = 'scoped memory for tpu_custom_call.1']
    %9 = vsyncpa [#allocation3], 0
    %s10 = scalar_lea.sflag [#allocation3], 1
    %11 = vsyncpa %s10, 0
    loop: start=0, step=1, limit=4
    $region2: #{tpu_custom_call.1} parent=1 // loop_pre_header
      _
    $region3: #{tpu_custom_call.1} parent=1 // loop_header
      %s13 = sphi 0, %s17
      %p14 = scmp.ge.s32.totalorder %s13, 4
      %s20 = sphi 0, %s39
      %s21 = sphi 0, %s35
      %s22 = sphi 0, %s31
      %s23 = sphi 0, %s20
      %s24 = sphi 0, %s21
      %s25 = sphi 0, %s22
      %s26 = sphi 0, %s23
      %s27 = sphi 0, %s24
      %s28 = sphi 0, %s25
      %s44 = sphi 0, %s46
      %s47 = sphi 0, %s44
      %s48 = sphi 0, %s47
      %s64 = sphi 0, %s48
      %s70 = sphi 0, %s72
      %s73 = sphi 0, %s70
      %s74 = sphi 0, %s73
      %s90 = sphi 0, %s74
      %s96 = sphi 0, %s98
      %s99 = sphi 0, %s96
      %s100 = sphi 0, %s99
      %s116 = sphi 0, %s100
      %s122 = sphi 0, %s124
      %s125 = sphi 0, %s122
      %s126 = sphi 0, %s125
      %s142 = sphi 0, %s126
      %s152 = sphi 0, %s154
      %s155 = sphi 0, %s152
      %s156 = sphi 0, %s155
      %s172 = sphi 0, %s156
    $region4: #{tpu_custom_call.1} parent=1 // loop_header_branch
      %16 = sbr.rel (%p14) target = $region8
    $region5: #{tpu_custom_call.1} parent=1 // loop_body
      %s18 = ssub.s32 %s13, 1
      %s19 = ssub.s32 %s13, 2
      %s29 = sadd.s32 1, %s22
      %p30 = scmp.ge.s32.totalorder %s29, 1
      %s31 = scalar_select %p30, 0, %s29
      %s32 = sadd.s32 1, %s21
      %s33 = scalar_select %p30, %s32, %s21
      %p34 = scmp.ge.s32.totalorder %s33, 1
      %s35 = scalar_select %p34, 0, %s33
      %s36 = sadd.s32 1, %s20
      %s37 = scalar_select %p34, %s36, %s20
      %p38 = scmp.ge.s32.totalorder %s37, 2
      %s39 = scalar_select %p38, 0, %s37
      %s40 = ssub.s32 %s20, %s39
      %s41 = ssub.s32 %s21, %s35
      %s42 = sor.u32 %s40, %s41
      %p43 = scmp.eq.s32.totalorder %s42, 0
      %s45 = sadd.s32 %s44, 1
      %s46 = scalar_select %p43, %s44, %s45
      %p49 = pneg %p43
      %p50 = scmp.eq.s32.totalorder %s13, 1
      %p51 = por %p49, %p50
      %p52 = scmp.ne.s32.totalorder %s44, %s47
      %p53 = scmp.eq.s32.totalorder %s13, 0
      %p54 = por %p52, %p53
      %p55 = scmp.ne.s32.totalorder %s44, %s47
      %p56 = scmp.eq.s32.totalorder %s18, 1
      %p57 = por %p55, %p56
      %p58 = scmp.ne.s32.totalorder %s47, %s48
      %p59 = scmp.eq.s32.totalorder %s18, 0
      %p60 = por %p58, %p59
      %p61 = scmp.ne.s32.totalorder %s47, %s48
      %p62 = scmp.eq.s32.totalorder %s19, 1
      %p63 = por %p61, %p62
      %p65 = scmp.ne.s32.totalorder %s48, %s64
      %p66 = scmp.eq.s32.totalorder %s19, 0
      %p67 = por %p65, %p66
      %s68 = ssub.s32 %s22, %s31
      %p69 = scmp.eq.s32.totalorder %s68, 0
      %s71 = sadd.s32 %s70, 1
      %s72 = scalar_select %p69, %s70, %s71
      %p75 = pneg %p69
      %p76 = scmp.eq.s32.totalorder %s13, 1
      %p77 = por %p75, %p76
      %p78 = scmp.ne.s32.totalorder %s70, %s73
      %p79 = scmp.eq.s32.totalorder %s13, 0
      %p80 = por %p78, %p79
      %p81 = scmp.ne.s32.totalorder %s70, %s73
      %p82 = scmp.eq.s32.totalorder %s18, 1
      %p83 = por %p81, %p82
      %p84 = scmp.ne.s32.totalorder %s73, %s74
      %p85 = scmp.eq.s32.totalorder %s18, 0
      %p86 = por %p84, %p85
      %p87 = scmp.ne.s32.totalorder %s73, %s74
      %p88 = scmp.eq.s32.totalorder %s19, 1
      %p89 = por %p87, %p88
      %p91 = scmp.ne.s32.totalorder %s74, %s90
      %p92 = scmp.eq.s32.totalorder %s19, 0
      %p93 = por %p91, %p92
      %s94 = ssub.s32 %s22, %s31
      %p95 = scmp.eq.s32.totalorder %s94, 0
      %s97 = sadd.s32 %s96, 1
      %s98 = scalar_select %p95, %s96, %s97
      %p101 = pneg %p95
      %p102 = scmp.eq.s32.totalorder %s13, 1
      %p103 = por %p101, %p102
      %p104 = scmp.ne.s32.totalorder %s96, %s99
      %p105 = scmp.eq.s32.totalorder %s13, 0
      %p106 = por %p104, %p105
      %p107 = scmp.ne.s32.totalorder %s96, %s99
      %p108 = scmp.eq.s32.totalorder %s18, 1
      %p109 = por %p107, %p108
      %p110 = scmp.ne.s32.totalorder %s99, %s100
      %p111 = scmp.eq.s32.totalorder %s18, 0
      %p112 = por %p110, %p111
      %p113 = scmp.ne.s32.totalorder %s99, %s100
      %p114 = scmp.eq.s32.totalorder %s19, 1
      %p115 = por %p113, %p114
      %p117 = scmp.ne.s32.totalorder %s100, %s116
      %p118 = scmp.eq.s32.totalorder %s19, 0
      %p119 = por %p117, %p118
      %s120 = ssub.s32 %s22, %s31
      %p121 = scmp.eq.s32.totalorder %s120, 0
      %s123 = sadd.s32 %s122, 1
      %s124 = scalar_select %p121, %s122, %s123
      %p127 = pneg %p121
      %p128 = scmp.eq.s32.totalorder %s13, 1
      %p129 = por %p127, %p128
      %p130 = scmp.ne.s32.totalorder %s122, %s125
      %p131 = scmp.eq.s32.totalorder %s13, 0
      %p132 = por %p130, %p131
      %p133 = scmp.ne.s32.totalorder %s122, %s125
      %p134 = scmp.eq.s32.totalorder %s18, 1
      %p135 = por %p133, %p134
      %p136 = scmp.ne.s32.totalorder %s125, %s126
      %p137 = scmp.eq.s32.totalorder %s18, 0
      %p138 = por %p136, %p137
      %p139 = scmp.ne.s32.totalorder %s125, %s126
      %p140 = scmp.eq.s32.totalorder %s19, 1
      %p141 = por %p139, %p140
      %p143 = scmp.ne.s32.totalorder %s126, %s142
      %p144 = scmp.eq.s32.totalorder %s19, 0
      %p145 = por %p143, %p144
      %s146 = ssub.s32 %s20, %s39
      %s147 = ssub.s32 %s21, %s35
      %s148 = sor.u32 %s146, %s147
      %s149 = ssub.s32 %s22, %s31
      %s150 = sor.u32 %s148, %s149
      %p151 = scmp.eq.s32.totalorder %s150, 0
      %s153 = sadd.s32 %s152, 1
      %s154 = scalar_select %p151, %s152, %s153
      %p157 = pneg %p151
      %p158 = scmp.eq.s32.totalorder %s13, 1
      %p159 = por %p157, %p158
      %p160 = scmp.ne.s32.totalorder %s152, %s155
      %p161 = scmp.eq.s32.totalorder %s13, 0
      %p162 = por %p160, %p161
      %p163 = scmp.ne.s32.totalorder %s152, %s155
      %p164 = scmp.eq.s32.totalorder %s18, 1
      %p165 = por %p163, %p164
      %p166 = scmp.ne.s32.totalorder %s155, %s156
      %p167 = scmp.eq.s32.totalorder %s18, 0
      %p168 = por %p166, %p167
      %p169 = scmp.ne.s32.totalorder %s155, %s156
      %p170 = scmp.eq.s32.totalorder %s19, 1
      %p171 = por %p169, %p170
      %p173 = scmp.ne.s32.totalorder %s156, %s172
      %p174 = scmp.eq.s32.totalorder %s19, 0
      %p175 = por %p173, %p174
      %p176 = scmp.le.s32.totalorder 1, %s13
      %p177 = scmp.lt.s32.totalorder %s13, 3
      %p178 = pnand %p176, %p177
      %p179 = pneg %p178
      // Predicated region
      $region9: #{tpu_custom_call.1} parent=5 // pred_check
        _
      $region10: #{tpu_custom_call.1} parent=5 // pred_check_branch
        %181 = sbr.rel (%p178) target = $region12
      $region11: #{tpu_custom_call.1} parent=5 // pred_region
        %s182 = ssub.s32 %s13, 1
        // Predicated region
        $region13: #{tpu_custom_call.1} parent=11 // pred_check
          %p183 = pneg %p86
        $region14: #{tpu_custom_call.1} parent=11 // pred_check_branch
          %185 = sbr.rel (%p183) target = $region16
        $region15: #{tpu_custom_call.1} parent=11 // pred_region
          %p186 = scmp.lt.s32.totalorder %s25, 0
          %s187 = scalar_select %p186, %s25, 0
          %s188 = smul.addr %s187, 8
          %s189 = scalar_lea.vmem %s1, %s188
        $region16: #{tpu_custom_call.1} parent=11 // pred_fallthru
          _
        // Predicated region
        $region17: #{tpu_custom_call.1} parent=11 // pred_check
          %p190 = pneg %p112
        $region18: #{tpu_custom_call.1} parent=11 // pred_check_branch
          %192 = sbr.rel (%p190) target = $region20
        $region19: #{tpu_custom_call.1} parent=11 // pred_region
          %p193 = scmp.lt.s32.totalorder %s25, 0
          %s194 = scalar_select %p193, %s25, 0
          %s195 = scalar_lea.vmem %s2, %s194
        $region20: #{tpu_custom_call.1} parent=11 // pred_fallthru
          _
        // Predicated region
        $region21: #{tpu_custom_call.1} parent=11 // pred_check
          %p196 = pneg %p138
        $region22: #{tpu_custom_call.1} parent=11 // pred_check_branch
          %198 = sbr.rel (%p196) target = $region24
        $region23: #{tpu_custom_call.1} parent=11 // pred_region
          %p199 = scmp.lt.s32.totalorder %s25, 0
          %s200 = scalar_select %p199, %s25, 0
          %s201 = scalar_lea.vmem %s3, %s200
        $region24: #{tpu_custom_call.1} parent=11 // pred_fallthru
          _
      $region12: #{tpu_custom_call.1} parent=5 // pred_fallthru
        _
      %p202 = scmp.lt.s32.totalorder %s13, 2
      // Predicated region
      $region25: #{tpu_custom_call.1} parent=5 // pred_check
        %p203 = pneg %p202
      $region26: #{tpu_custom_call.1} parent=5 // pred_check_branch
        %205 = sbr.rel (%p203) target = $region28
      $region27: #{tpu_custom_call.1} parent=5 // pred_region
        // Predicated region
        $region29: #{tpu_custom_call.1} parent=27 // pred_check
          %p206 = pneg %p54
        $region30: #{tpu_custom_call.1} parent=27 // pred_check_branch
          %208 = sbr.rel (%p206) target = $region32
        $region31: #{tpu_custom_call.1} parent=27 // pred_region
          %s209 = sand.u32 %s44, 1
          %s210 = scalar_lea.sflag [#allocation3], %s209
          %s211 = sand.u32 %s44, 1
          %s212 = smul.addr %s211, 256
          %s213 = scalar_lea.vmem [#allocation2], %s212
          %s214 = smul.u32 16, %s21
          %216 = vsyncadd %s210, 0
          %s217 = smul.addr %s214, 2
          %s218 = smul.addr %s20, 32
          %s219 = sadd.s32 %s217, %s218
          %s220 = smul.addr %s219, 8
          %s221 = scalar_lea.hbm %s0, %s220
          %s222 = sshll.u32 %s221, 4
          %s223 = int_to_ptr.hbm [resolvable:$true] %s222
          %s224 = sshll.u32 %s213, 4
          %s225 = int_to_ptr.vmem [resolvable:$true] %s224
          %230 = dma.hbm_to_vmem [thread:$0]  %s223, 4096, %s225, %s210, 128, 128, 8
        $region32: #{tpu_custom_call.1} parent=27 // pred_fallthru
          _
      $region28: #{tpu_custom_call.1} parent=5 // pred_fallthru
        _
      %p231 = scmp.le.s32.totalorder 1, %s13
      %p232 = scmp.lt.s32.totalorder %s13, 3
      %p233 = pnand %p231, %p232
      %p234 = pneg %p233
      // Predicated region
      $region33: #{tpu_custom_call.1} parent=5 // pred_check
        _
      $region34: #{tpu_custom_call.1} parent=5 // pred_check_branch
        %236 = sbr.rel (%p233) target = $region36
      $region35: #{tpu_custom_call.1} parent=5 // pred_region
        %s237 = ssub.s32 %s13, 1
        %s238 = sand.u32 %s47, 1
        %s239 = scalar_lea.sflag [#allocation3], %s238
        %s240 = sand.u32 %s47, 1
        %s241 = smul.addr %s240, 256
        %s242 = scalar_lea.vmem [#allocation2], %s241
        // Predicated region
        $region37: #{tpu_custom_call.1} parent=35 // pred_check
          %p243 = pneg %p60
        $region38: #{tpu_custom_call.1} parent=35 // pred_check_branch
          %245 = sbr.rel (%p243) target = $region40
        $region39: #{tpu_custom_call.1} parent=35 // pred_region
          %247 = dma.done %s239, 4096
        $region40: #{tpu_custom_call.1} parent=35 // pred_fallthru
          _
        %s248 = sand.u32 %s47, 1
        %s249 = scalar_lea.sflag [#allocation3], %s248
        %s250 = sand.u32 %s47, 1
        %s251 = smul.addr %s250, 256
        %s252 = scalar_lea.vmem [#allocation2], %s251
        %p253 = pneg %p60
        %p254 = pneg %p57
        %p255 = scmp.lt.s32.totalorder %s25, 0
        %s256 = scalar_select %p255, %s25, 0
        %s257 = smul.addr %s256, 8
        %s258 = scalar_lea.vmem %s1, %s257
        %p259 = pneg %p86
        %p260 = pneg %p83
        %p261 = scmp.lt.s32.totalorder %s25, 0
        %s262 = scalar_select %p261, %s25, 0
        %s263 = scalar_lea.vmem %s2, %s262
        %p264 = pneg %p112
        %p265 = pneg %p109
        %p266 = scmp.lt.s32.totalorder %s25, 0
        %s267 = scalar_select %p266, %s25, 0
        %s268 = scalar_lea.vmem %s3, %s267
        %p269 = pneg %p138
        %p270 = pneg %p135
        %p271 = pneg %p168
        %p272 = pneg %p165
        %s273 = smul.u32 16, %s24
        %p274 = scmp.lt.s32.totalorder %s23, 1
        %s275 = scalar_select %p274, %s23, 1
        %p276 = scmp.lt.s32.totalorder %s273, 15
        %s277 = scalar_select %p276, %s273, 15
        %p278 = scmp.lt.s32.totalorder %s25, 0
        %s279 = scalar_select %p278, %s25, 0
        %s280 = smul.addr %s277, 2
        %s281 = sadd.s32 %s279, %s280
        %s282 = smul.addr %s275, 32
        %s283 = sadd.s32 %s281, %s282
        %s284 = smul.addr %s283, 8
        %s285 = scalar_lea.vmem %s4, %s284
        %s286 = smul.u32 16, %s24
        %p287 = scmp.lt.s32.totalorder %s25, 0
        %s288 = scalar_select %p287, %s25, 0
        %s289 = smul.addr %s288, 8
        %s290 = scalar_lea.vmem %s1, %s289
        %p291 = scmp.lt.s32.totalorder %s25, 0
        %s292 = scalar_select %p291, %s25, 0
        %s293 = scalar_lea.vmem %s2, %s292
        %p294 = scmp.lt.s32.totalorder %s25, 0
        %s295 = scalar_select %p294, %s25, 0
        %s296 = scalar_lea.vmem %s3, %s295
        %s297 = smul.u32 16, %s24
        %p298 = scmp.lt.s32.totalorder %s23, 1
        %s299 = scalar_select %p298, %s23, 1
        %p300 = scmp.lt.s32.totalorder %s297, 15
        %s301 = scalar_select %p300, %s297, 15
        %p302 = scmp.lt.s32.totalorder %s25, 0
        %s303 = scalar_select %p302, %s25, 0
        %s304 = smul.addr %s301, 2
        %s305 = sadd.s32 %s303, %s304
        %s306 = smul.addr %s299, 32
        %s307 = sadd.s32 %s305, %s306
        %s308 = smul.addr %s307, 8
        %s309 = scalar_lea.vmem %s4, %s308
        %s310 = smul.u32 16, %s24
        %v311 = vld [vmem:[%s242] sm:$0xff]
        %v312 = vld [vmem:[%s242 + $0x8] sm:$0xff]
        %v313 = vld [vmem:[%s242 + $0x10] sm:$0xff]
        %v314 = vld [vmem:[%s242 + $0x18] sm:$0xff]
        %v315 = vld [vmem:[%s242 + $0x20] sm:$0xff]
        %v316 = vld [vmem:[%s242 + $0x28] sm:$0xff]
        %v317 = vld [vmem:[%s242 + $0x30] sm:$0xff]
        %v318 = vld [vmem:[%s242 + $0x38] sm:$0xff]
        %v319 = vld [vmem:[%s242 + $0x40] sm:$0xff]
        %v320 = vld [vmem:[%s242 + $0x48] sm:$0xff]
        %v321 = vld [vmem:[%s242 + $0x50] sm:$0xff]
        %v322 = vld [vmem:[%s242 + $0x58] sm:$0xff]
        %v323 = vld [vmem:[%s242 + $0x60] sm:$0xff]
        %v324 = vld [vmem:[%s242 + $0x68] sm:$0xff]
        %v325 = vld [vmem:[%s242 + $0x70] sm:$0xff]
        %v326 = vld [vmem:[%s242 + $0x78] sm:$0xff]
        %v327 = vld [vmem:[%s242 + $0x80] sm:$0xff]
        %v328 = vld [vmem:[%s242 + $0x88] sm:$0xff]
        %v329 = vld [vmem:[%s242 + $0x90] sm:$0xff]
        %v330 = vld [vmem:[%s242 + $0x98] sm:$0xff]
        %v331 = vld [vmem:[%s242 + $0xa0] sm:$0xff]
        %v332 = vld [vmem:[%s242 + $0xa8] sm:$0xff]
        %v333 = vld [vmem:[%s242 + $0xb0] sm:$0xff]
        %v334 = vld [vmem:[%s242 + $0xb8] sm:$0xff]
        %v335 = vld [vmem:[%s242 + $0xc0] sm:$0xff]
        %v336 = vld [vmem:[%s242 + $0xc8] sm:$0xff]
        %v337 = vld [vmem:[%s242 + $0xd0] sm:$0xff]
        %v338 = vld [vmem:[%s242 + $0xd8] sm:$0xff]
        %v339 = vld [vmem:[%s242 + $0xe0] sm:$0xff]
        %v340 = vld [vmem:[%s242 + $0xe8] sm:$0xff]
        %v341 = vld [vmem:[%s242 + $0xf0] sm:$0xff]
        %v342 = vld [vmem:[%s242 + $0xf8] sm:$0xff]
        %v343 = vld [vmem:[%s290] sm:$0xff]
        %v344 = vld [vmem:[%s290 + $0x8] sm:$0xff]
        %v345 = vld [vmem:[%s290 + $0x10] sm:$0xff]
        %v346 = vld [vmem:[%s290 + $0x18] sm:$0xff]
        %v347 = vld [vmem:[%s290 + $0x20] sm:$0xf]
        %vm348 = vcmask 293888
        %v350 = vsel %vm348, %v311, 0
        %v353 = vsel %vm348, %v312, 0
        %v356 = vsel %vm348, %v313, 0
        %v359 = vsel %vm348, %v314, 0
        %v362 = vsel %vm348, %v315, 0
        %v365 = vsel %vm348, %v316, 0
        %v368 = vsel %vm348, %v317, 0
        %v371 = vsel %vm348, %v318, 0
        %v374 = vsel %vm348, %v319, 0
        %v377 = vsel %vm348, %v320, 0
        %v380 = vsel %vm348, %v321, 0
        %v383 = vsel %vm348, %v322, 0
        %v386 = vsel %vm348, %v323, 0
        %v389 = vsel %vm348, %v324, 0
        %v392 = vsel %vm348, %v325, 0
        %v395 = vsel %vm348, %v326, 0
        %v398 = vsel %vm348, %v327, 0
        %v401 = vsel %vm348, %v328, 0
        %v404 = vsel %vm348, %v329, 0
        %v407 = vsel %vm348, %v330, 0
        %v410 = vsel %vm348, %v331, 0
        %v413 = vsel %vm348, %v332, 0
        %v416 = vsel %vm348, %v333, 0
        %v419 = vsel %vm348, %v334, 0
        %v422 = vsel %vm348, %v335, 0
        %v425 = vsel %vm348, %v336, 0
        %v428 = vsel %vm348, %v337, 0
        %v431 = vsel %vm348, %v338, 0
        %v434 = vsel %vm348, %v339, 0
        %v437 = vsel %vm348, %v340, 0
        %v440 = vsel %vm348, %v341, 0
        %v443 = vsel %vm348, %v342, 0
        %vm445 = vcmask 1043456
        %v447 = vsel %vm445, %v347, 0
        %449 = vmatpush.msra.mxu0 0.0
        %450 = vmatpush.msra.mxu0 0.0
        %451 = vmatpush.msra.mxu0 0.0
        %452 = vmatpush.msra.mxu0 0.0
        %453 = vmatpush.msra.mxu0 0.0
        %454 = vmatpush.msra.mxu0 0.0
        %455 = vmatpush.msra.mxu0 0.0
        %456 = vmatpush.msra.mxu0 0.0
        %457 = vmatpush.msra.mxu0 0.0
        %458 = vmatpush.msra.mxu0 0.0
        %459 = vmatpush.msra.mxu0 0.0
        %460 = vmatpush.msra.mxu0 %v447
        %461 = vmatpush.msra.mxu0 %v346
        %462 = vmatpush.msra.mxu0 %v345
        %463 = vmatpush.msra.mxu0 %v344
        %464 = vmatpush.msra.mxu0 %v343
        %465 = vmatmul.f32.gmra.mxu0 %v350
        %v466 = vpop.f32.mrf.mxu0
        %v467 = vadd.f32 0.0, %v466
        %468 = vmatmul.f32.gmra.mxu0 %v353
        %v469 = vpop.f32.mrf.mxu0
        %v470 = vadd.f32 0.0, %v469
        %471 = vmatmul.f32.gmra.mxu0 %v356
        %v472 = vpop.f32.mrf.mxu0
        %v473 = vadd.f32 0.0, %v472
        %474 = vmatmul.f32.gmra.mxu0 %v359
        %v475 = vpop.f32.mrf.mxu0
        %v476 = vadd.f32 0.0, %v475
        %477 = vmatmul.f32.gmra.mxu0 %v362
        %v478 = vpop.f32.mrf.mxu0
        %v479 = vadd.f32 0.0, %v478
        %480 = vmatmul.f32.gmra.mxu0 %v365
        %v481 = vpop.f32.mrf.mxu0
        %v482 = vadd.f32 0.0, %v481
        %483 = vmatmul.f32.gmra.mxu0 %v368
        %v484 = vpop.f32.mrf.mxu0
        %v485 = vadd.f32 0.0, %v484
        %486 = vmatmul.f32.gmra.mxu0 %v371
        %v487 = vpop.f32.mrf.mxu0
        %v488 = vadd.f32 0.0, %v487
        %489 = vmatmul.f32.gmra.mxu0 %v374
        %v490 = vpop.f32.mrf.mxu0
        %v491 = vadd.f32 0.0, %v490
        %492 = vmatmul.f32.gmra.mxu0 %v377
        %v493 = vpop.f32.mrf.mxu0
        %v494 = vadd.f32 0.0, %v493
        %495 = vmatmul.f32.gmra.mxu0 %v380
        %v496 = vpop.f32.mrf.mxu0
        %v497 = vadd.f32 0.0, %v496
        %498 = vmatmul.f32.gmra.mxu0 %v383
        %v499 = vpop.f32.mrf.mxu0
        %v500 = vadd.f32 0.0, %v499
        %501 = vmatmul.f32.gmra.mxu0 %v386
        %v502 = vpop.f32.mrf.mxu0
        %v503 = vadd.f32 0.0, %v502
        %504 = vmatmul.f32.gmra.mxu0 %v389
        %v505 = vpop.f32.mrf.mxu0
        %v506 = vadd.f32 0.0, %v505
        %507 = vmatmul.f32.gmra.mxu0 %v392
        %v508 = vpop.f32.mrf.mxu0
        %v509 = vadd.f32 0.0, %v508
        %510 = vmatmul.f32.gmra.mxu0 %v395
        %v511 = vpop.f32.mrf.mxu0
        %v512 = vadd.f32 0.0, %v511
        %513 = vmatmul.f32.gmra.mxu0 %v398
        %v514 = vpop.f32.mrf.mxu0
        %v515 = vadd.f32 0.0, %v514
        %516 = vmatmul.f32.gmra.mxu0 %v401
        %v517 = vpop.f32.mrf.mxu0
        %v518 = vadd.f32 0.0, %v517
        %519 = vmatmul.f32.gmra.mxu0 %v404
        %v520 = vpop.f32.mrf.mxu0
        %v521 = vadd.f32 0.0, %v520
        %522 = vmatmul.f32.gmra.mxu0 %v407
        %v523 = vpop.f32.mrf.mxu0
        %v524 = vadd.f32 0.0, %v523
        %525 = vmatmul.f32.gmra.mxu0 %v410
        %v526 = vpop.f32.mrf.mxu0
        %v527 = vadd.f32 0.0, %v526
        %528 = vmatmul.f32.gmra.mxu0 %v413
        %v529 = vpop.f32.mrf.mxu0
        %v530 = vadd.f32 0.0, %v529
        %531 = vmatmul.f32.gmra.mxu0 %v416
        %v532 = vpop.f32.mrf.mxu0
        %v533 = vadd.f32 0.0, %v532
        %534 = vmatmul.f32.gmra.mxu0 %v419
        %v535 = vpop.f32.mrf.mxu0
        %v536 = vadd.f32 0.0, %v535
        %537 = vmatmul.f32.gmra.mxu0 %v422
        %v538 = vpop.f32.mrf.mxu0
        %v539 = vadd.f32 0.0, %v538
        %540 = vmatmul.f32.gmra.mxu0 %v425
        %v541 = vpop.f32.mrf.mxu0
        %v542 = vadd.f32 0.0, %v541
        %543 = vmatmul.f32.gmra.mxu0 %v428
        %v544 = vpop.f32.mrf.mxu0
        %v545 = vadd.f32 0.0, %v544
        %546 = vmatmul.f32.gmra.mxu0 %v431
        %v547 = vpop.f32.mrf.mxu0
        %v548 = vadd.f32 0.0, %v547
        %549 = vmatmul.f32.gmra.mxu0 %v434
        %v550 = vpop.f32.mrf.mxu0
        %v551 = vadd.f32 0.0, %v550
        %552 = vmatmul.f32.gmra.mxu0 %v437
        %v553 = vpop.f32.mrf.mxu0
        %v554 = vadd.f32 0.0, %v553
        %555 = vmatmul.f32.gmra.mxu0 %v440
        %v556 = vpop.f32.mrf.mxu0
        %v557 = vadd.f32 0.0, %v556
        %558 = vmatmul.f32.gmra.mxu0 %v443
        %v559 = vpop.f32.mrf.mxu0
        %v560 = vadd.f32 0.0, %v559
        %561 = vdwg.mxu0
        %v562 = vld [vmem:[%s293] sm:$0x1]
        %v564 = vperm.slane %v562, 0
        %v566 = vmul.f32 %v467, %v564
        %v567 = vmul.f32 %v470, %v564
        %v568 = vmul.f32 %v473, %v564
        %v569 = vmul.f32 %v476, %v564
        %v570 = vmul.f32 %v479, %v564
        %v571 = vmul.f32 %v482, %v564
        %v572 = vmul.f32 %v485, %v564
        %v573 = vmul.f32 %v488, %v564
        %v574 = vmul.f32 %v491, %v564
        %v575 = vmul.f32 %v494, %v564
        %v576 = vmul.f32 %v497, %v564
        %v577 = vmul.f32 %v500, %v564
        %v578 = vmul.f32 %v503, %v564
        %v579 = vmul.f32 %v506, %v564
        %v580 = vmul.f32 %v509, %v564
        %v581 = vmul.f32 %v512, %v564
        %v582 = vmul.f32 %v515, %v564
        %v583 = vmul.f32 %v518, %v564
        %v584 = vmul.f32 %v521, %v564
        %v585 = vmul.f32 %v524, %v564
        %v586 = vmul.f32 %v527, %v564
        %v587 = vmul.f32 %v530, %v564
        %v588 = vmul.f32 %v533, %v564
        %v589 = vmul.f32 %v536, %v564
        %v590 = vmul.f32 %v539, %v564
        %v591 = vmul.f32 %v542, %v564
        %v592 = vmul.f32 %v545, %v564
        %v593 = vmul.f32 %v548, %v564
        %v594 = vmul.f32 %v551, %v564
        %v595 = vmul.f32 %v554, %v564
        %v596 = vmul.f32 %v557, %v564
        %v597 = vmul.f32 %v560, %v564
        %v598 = vld [vmem:[%s296] sm:$0x1]
        %v600 = vperm.slane %v598, 0
        %v602 = vadd.f32 %v566, %v600
        %v603 = vadd.f32 %v567, %v600
        %v604 = vadd.f32 %v568, %v600
        %v605 = vadd.f32 %v569, %v600
        %v606 = vadd.f32 %v570, %v600
        %v607 = vadd.f32 %v571, %v600
        %v608 = vadd.f32 %v572, %v600
        %v609 = vadd.f32 %v573, %v600
        %v610 = vadd.f32 %v574, %v600
        %v611 = vadd.f32 %v575, %v600
        %v612 = vadd.f32 %v576, %v600
        %v613 = vadd.f32 %v577, %v600
        %v614 = vadd.f32 %v578, %v600
        %v615 = vadd.f32 %v579, %v600
        %v616 = vadd.f32 %v580, %v600
        %v617 = vadd.f32 %v581, %v600
        %v618 = vadd.f32 %v582, %v600
        %v619 = vadd.f32 %v583, %v600
        %v620 = vadd.f32 %v584, %v600
        %v621 = vadd.f32 %v585, %v600
        %v622 = vadd.f32 %v586, %v600
        %v623 = vadd.f32 %v587, %v600
        %v624 = vadd.f32 %v588, %v600
        %v625 = vadd.f32 %v589, %v600
        %v626 = vadd.f32 %v590, %v600
        %v627 = vadd.f32 %v591, %v600
        %v628 = vadd.f32 %v592, %v600
        %v629 = vadd.f32 %v593, %v600
        %v630 = vadd.f32 %v594, %v600
        %v631 = vadd.f32 %v595, %v600
        %v632 = vadd.f32 %v596, %v600
        %v633 = vadd.f32 %v597, %v600
        %v634 = vxor.u32 %v602, 2147483648
        %v635 = vxor.u32 %v603, 2147483648
        %v636 = vxor.u32 %v604, 2147483648
        %v637 = vxor.u32 %v605, 2147483648
        %v638 = vxor.u32 %v606, 2147483648
        %v639 = vxor.u32 %v607, 2147483648
        %v640 = vxor.u32 %v608, 2147483648
        %v641 = vxor.u32 %v609, 2147483648
        %v642 = vxor.u32 %v610, 2147483648
        %v643 = vxor.u32 %v611, 2147483648
        %v644 = vxor.u32 %v612, 2147483648
        %v645 = vxor.u32 %v613, 2147483648
        %v646 = vxor.u32 %v614, 2147483648
        %v647 = vxor.u32 %v615, 2147483648
        %v648 = vxor.u32 %v616, 2147483648
        %v649 = vxor.u32 %v617, 2147483648
        %v650 = vxor.u32 %v618, 2147483648
        %v651 = vxor.u32 %v619, 2147483648
        %v652 = vxor.u32 %v620, 2147483648
        %v653 = vxor.u32 %v621, 2147483648
        %v654 = vxor.u32 %v622, 2147483648
        %v655 = vxor.u32 %v623, 2147483648
        %v656 = vxor.u32 %v624, 2147483648
        %v657 = vxor.u32 %v625, 2147483648
        %v658 = vxor.u32 %v626, 2147483648
        %v659 = vxor.u32 %v627, 2147483648
        %v660 = vxor.u32 %v628, 2147483648
        %v661 = vxor.u32 %v629, 2147483648
        %v662 = vxor.u32 %v630, 2147483648
        %v663 = vxor.u32 %v631, 2147483648
        %v664 = vxor.u32 %v632, 2147483648
        %v665 = vxor.u32 %v633, 2147483648
        %v666 = vmul.f32 %v634, 1.442695
        %v667 = vpow.pop %v666
        %v668 = vmul.f32 %v635, 1.442695
        %v669 = vpow.pop %v668
        %v670 = vmul.f32 %v636, 1.442695
        %v671 = vpow.pop %v670
        %v672 = vmul.f32 %v637, 1.442695
        %v673 = vpow.pop %v672
        %v674 = vmul.f32 %v638, 1.442695
        %v675 = vpow.pop %v674
        %v676 = vmul.f32 %v639, 1.442695
        %v677 = vpow.pop %v676
        %v678 = vmul.f32 %v640, 1.442695
        %v679 = vpow.pop %v678
        %v680 = vmul.f32 %v641, 1.442695
        %v681 = vpow.pop %v680
        %v682 = vmul.f32 %v642, 1.442695
        %v683 = vpow.pop %v682
        %v684 = vmul.f32 %v643, 1.442695
        %v685 = vpow.pop %v684
        %v686 = vmul.f32 %v644, 1.442695
        %v687 = vpow.pop %v686
        %v688 = vmul.f32 %v645, 1.442695
        %v689 = vpow.pop %v688
        %v690 = vmul.f32 %v646, 1.442695
        %v691 = vpow.pop %v690
        %v692 = vmul.f32 %v647, 1.442695
        %v693 = vpow.pop %v692
        %v694 = vmul.f32 %v648, 1.442695
        %v695 = vpow.pop %v694
        %v696 = vmul.f32 %v649, 1.442695
        %v697 = vpow.pop %v696
        %v698 = vmul.f32 %v650, 1.442695
        %v699 = vpow.pop %v698
        %v700 = vmul.f32 %v651, 1.442695
        %v701 = vpow.pop %v700
        %v702 = vmul.f32 %v652, 1.442695
        %v703 = vpow.pop %v702
        %v704 = vmul.f32 %v653, 1.442695
        %v705 = vpow.pop %v704
        %v706 = vmul.f32 %v654, 1.442695
        %v707 = vpow.pop %v706
        %v708 = vmul.f32 %v655, 1.442695
        %v709 = vpow.pop %v708
        %v710 = vmul.f32 %v656, 1.442695
        %v711 = vpow.pop %v710
        %v712 = vmul.f32 %v657, 1.442695
        %v713 = vpow.pop %v712
        %v714 = vmul.f32 %v658, 1.442695
        %v715 = vpow.pop %v714
        %v716 = vmul.f32 %v659, 1.442695
        %v717 = vpow.pop %v716
        %v718 = vmul.f32 %v660, 1.442695
        %v719 = vpow.pop %v718
        %v720 = vmul.f32 %v661, 1.442695
        %v721 = vpow.pop %v720
        %v722 = vmul.f32 %v662, 1.442695
        %v723 = vpow.pop %v722
        %v724 = vmul.f32 %v663, 1.442695
        %v725 = vpow.pop %v724
        %v726 = vmul.f32 %v664, 1.442695
        %v727 = vpow.pop %v726
        %v728 = vmul.f32 %v665, 1.442695
        %v729 = vpow.pop %v728
        %v730 = vadd.f32 %v667, 1.0
        %v731 = vadd.f32 %v669, 1.0
        %v732 = vadd.f32 %v671, 1.0
        %v733 = vadd.f32 %v673, 1.0
        %v734 = vadd.f32 %v675, 1.0
        %v735 = vadd.f32 %v677, 1.0
        %v736 = vadd.f32 %v679, 1.0
        %v737 = vadd.f32 %v681, 1.0
        %v738 = vadd.f32 %v683, 1.0
        %v739 = vadd.f32 %v685, 1.0
        %v740 = vadd.f32 %v687, 1.0
        %v741 = vadd.f32 %v689, 1.0
        %v742 = vadd.f32 %v691, 1.0
        %v743 = vadd.f32 %v693, 1.0
        %v744 = vadd.f32 %v695, 1.0
        %v745 = vadd.f32 %v697, 1.0
        %v746 = vadd.f32 %v699, 1.0
        %v747 = vadd.f32 %v701, 1.0
        %v748 = vadd.f32 %v703, 1.0
        %v749 = vadd.f32 %v705, 1.0
        %v750 = vadd.f32 %v707, 1.0
        %v751 = vadd.f32 %v709, 1.0
        %v752 = vadd.f32 %v711, 1.0
        %v753 = vadd.f32 %v713, 1.0
        %v754 = vadd.f32 %v715, 1.0
        %v755 = vadd.f32 %v717, 1.0
        %v756 = vadd.f32 %v719, 1.0
        %v757 = vadd.f32 %v721, 1.0
        %v758 = vadd.f32 %v723, 1.0
        %v759 = vadd.f32 %v725, 1.0
        %v760 = vadd.f32 %v727, 1.0
        %v761 = vadd.f32 %v729, 1.0
        %v762 = vrcp.pop %v730
        %v763 = vmul.f32 %v730, %v762
        %v764 = vsub.f32 1.0, %v763
        %v765 = vmul.f32 %v762, %v764
        %v766 = vadd.f32 %v762, %v765
        %vm767 = vweird.f32 %v730
        %vm768 = vweird.f32 %v762
        %vm769 = vmor %vm767, %vm768
        %v770 = vsel %vm769, %v762, %v766
        %v771 = vand.u32 2147483647, %v730
        %vm772 = vcmp.eq.f32.partialorder %v771, 8.507059e+37
        %v773 = vand.u32 %v730, 2147483648
        %v774 = vor.u32 1.1754944e-38, %v773
        %v775 = vsel %vm772, %v774, %v770
        %v776 = vmul.f32 1.0, %v775
        %v777 = vrcp.pop %v731
        %v778 = vmul.f32 %v731, %v777
        %v779 = vsub.f32 1.0, %v778
        %v780 = vmul.f32 %v777, %v779
        %v781 = vadd.f32 %v777, %v780
        %vm782 = vweird.f32 %v731
        %vm783 = vweird.f32 %v777
        %vm784 = vmor %vm782, %vm783
        %v785 = vsel %vm784, %v777, %v781
        %v786 = vand.u32 2147483647, %v731
        %vm787 = vcmp.eq.f32.partialorder %v786, 8.507059e+37
        %v788 = vand.u32 %v731, 2147483648
        %v789 = vor.u32 1.1754944e-38, %v788
        %v790 = vsel %vm787, %v789, %v785
        %v791 = vmul.f32 1.0, %v790
        %v792 = vrcp.pop %v732
        %v793 = vmul.f32 %v732, %v792
        %v794 = vsub.f32 1.0, %v793
        %v795 = vmul.f32 %v792, %v794
        %v796 = vadd.f32 %v792, %v795
        %vm797 = vweird.f32 %v732
        %vm798 = vweird.f32 %v792
        %vm799 = vmor %vm797, %vm798
        %v800 = vsel %vm799, %v792, %v796
        %v801 = vand.u32 2147483647, %v732
        %vm802 = vcmp.eq.f32.partialorder %v801, 8.507059e+37
        %v803 = vand.u32 %v732, 2147483648
        %v804 = vor.u32 1.1754944e-38, %v803
        %v805 = vsel %vm802, %v804, %v800
        %v806 = vmul.f32 1.0, %v805
        %v807 = vrcp.pop %v733
        %v808 = vmul.f32 %v733, %v807
        %v809 = vsub.f32 1.0, %v808
        %v810 = vmul.f32 %v807, %v809
        %v811 = vadd.f32 %v807, %v810
        %vm812 = vweird.f32 %v733
        %vm813 = vweird.f32 %v807
        %vm814 = vmor %vm812, %vm813
        %v815 = vsel %vm814, %v807, %v811
        %v816 = vand.u32 2147483647, %v733
        %vm817 = vcmp.eq.f32.partialorder %v816, 8.507059e+37
        %v818 = vand.u32 %v733, 2147483648
        %v819 = vor.u32 1.1754944e-38, %v818
        %v820 = vsel %vm817, %v819, %v815
        %v821 = vmul.f32 1.0, %v820
        %v822 = vrcp.pop %v734
        %v823 = vmul.f32 %v734, %v822
        %v824 = vsub.f32 1.0, %v823
        %v825 = vmul.f32 %v822, %v824
        %v826 = vadd.f32 %v822, %v825
        %vm827 = vweird.f32 %v734
        %vm828 = vweird.f32 %v822
        %vm829 = vmor %vm827, %vm828
        %v830 = vsel %vm829, %v822, %v826
        %v831 = vand.u32 2147483647, %v734
        %vm832 = vcmp.eq.f32.partialorder %v831, 8.507059e+37
        %v833 = vand.u32 %v734, 2147483648
        %v834 = vor.u32 1.1754944e-38, %v833
        %v835 = vsel %vm832, %v834, %v830
        %v836 = vmul.f32 1.0, %v835
        %v837 = vrcp.pop %v735
        %v838 = vmul.f32 %v735, %v837
        %v839 = vsub.f32 1.0, %v838
        %v840 = vmul.f32 %v837, %v839
        %v841 = vadd.f32 %v837, %v840
        %vm842 = vweird.f32 %v735
        %vm843 = vweird.f32 %v837
        %vm844 = vmor %vm842, %vm843
        %v845 = vsel %vm844, %v837, %v841
        %v846 = vand.u32 2147483647, %v735
        %vm847 = vcmp.eq.f32.partialorder %v846, 8.507059e+37
        %v848 = vand.u32 %v735, 2147483648
        %v849 = vor.u32 1.1754944e-38, %v848
        %v850 = vsel %vm847, %v849, %v845
        %v851 = vmul.f32 1.0, %v850
        %v852 = vrcp.pop %v736
        %v853 = vmul.f32 %v736, %v852
        %v854 = vsub.f32 1.0, %v853
        %v855 = vmul.f32 %v852, %v854
        %v856 = vadd.f32 %v852, %v855
        %vm857 = vweird.f32 %v736
        %vm858 = vweird.f32 %v852
        %vm859 = vmor %vm857, %vm858
        %v860 = vsel %vm859, %v852, %v856
        %v861 = vand.u32 2147483647, %v736
        %vm862 = vcmp.eq.f32.partialorder %v861, 8.507059e+37
        %v863 = vand.u32 %v736, 2147483648
        %v864 = vor.u32 1.1754944e-38, %v863
        %v865 = vsel %vm862, %v864, %v860
        %v866 = vmul.f32 1.0, %v865
        %v867 = vrcp.pop %v737
        %v868 = vmul.f32 %v737, %v867
        %v869 = vsub.f32 1.0, %v868
        %v870 = vmul.f32 %v867, %v869
        %v871 = vadd.f32 %v867, %v870
        %vm872 = vweird.f32 %v737
        %vm873 = vweird.f32 %v867
        %vm874 = vmor %vm872, %vm873
        %v875 = vsel %vm874, %v867, %v871
        %v876 = vand.u32 2147483647, %v737
        %vm877 = vcmp.eq.f32.partialorder %v876, 8.507059e+37
        %v878 = vand.u32 %v737, 2147483648
        %v879 = vor.u32 1.1754944e-38, %v878
        %v880 = vsel %vm877, %v879, %v875
        %v881 = vmul.f32 1.0, %v880
        %v882 = vrcp.pop %v738
        %v883 = vmul.f32 %v738, %v882
        %v884 = vsub.f32 1.0, %v883
        %v885 = vmul.f32 %v882, %v884
        %v886 = vadd.f32 %v882, %v885
        %vm887 = vweird.f32 %v738
        %vm888 = vweird.f32 %v882
        %vm889 = vmor %vm887, %vm888
        %v890 = vsel %vm889, %v882, %v886
        %v891 = vand.u32 2147483647, %v738
        %vm892 = vcmp.eq.f32.partialorder %v891, 8.507059e+37
        %v893 = vand.u32 %v738, 2147483648
        %v894 = vor.u32 1.1754944e-38, %v893
        %v895 = vsel %vm892, %v894, %v890
        %v896 = vmul.f32 1.0, %v895
        %v897 = vrcp.pop %v739
        %v898 = vmul.f32 %v739, %v897
        %v899 = vsub.f32 1.0, %v898
        %v900 = vmul.f32 %v897, %v899
        %v901 = vadd.f32 %v897, %v900
        %vm902 = vweird.f32 %v739
        %vm903 = vweird.f32 %v897
        %vm904 = vmor %vm902, %vm903
        %v905 = vsel %vm904, %v897, %v901
        %v906 = vand.u32 2147483647, %v739
        %vm907 = vcmp.eq.f32.partialorder %v906, 8.507059e+37
        %v908 = vand.u32 %v739, 2147483648
        %v909 = vor.u32 1.1754944e-38, %v908
        %v910 = vsel %vm907, %v909, %v905
        %v911 = vmul.f32 1.0, %v910
        %v912 = vrcp.pop %v740
        %v913 = vmul.f32 %v740, %v912
        %v914 = vsub.f32 1.0, %v913
        %v915 = vmul.f32 %v912, %v914
        %v916 = vadd.f32 %v912, %v915
        %vm917 = vweird.f32 %v740
        %vm918 = vweird.f32 %v912
        %vm919 = vmor %vm917, %vm918
        %v920 = vsel %vm919, %v912, %v916
        %v921 = vand.u32 2147483647, %v740
        %vm922 = vcmp.eq.f32.partialorder %v921, 8.507059e+37
        %v923 = vand.u32 %v740, 2147483648
        %v924 = vor.u32 1.1754944e-38, %v923
        %v925 = vsel %vm922, %v924, %v920
        %v926 = vmul.f32 1.0, %v925
        %v927 = vrcp.pop %v741
        %v928 = vmul.f32 %v741, %v927
        %v929 = vsub.f32 1.0, %v928
        %v930 = vmul.f32 %v927, %v929
        %v931 = vadd.f32 %v927, %v930
        %vm932 = vweird.f32 %v741
        %vm933 = vweird.f32 %v927
        %vm934 = vmor %vm932, %vm933
        %v935 = vsel %vm934, %v927, %v931
        %v936 = vand.u32 2147483647, %v741
        %vm937 = vcmp.eq.f32.partialorder %v936, 8.507059e+37
        %v938 = vand.u32 %v741, 2147483648
        %v939 = vor.u32 1.1754944e-38, %v938
        %v940 = vsel %vm937, %v939, %v935
        %v941 = vmul.f32 1.0, %v940
        %v942 = vrcp.pop %v742
        %v943 = vmul.f32 %v742, %v942
        %v944 = vsub.f32 1.0, %v943
        %v945 = vmul.f32 %v942, %v944
        %v946 = vadd.f32 %v942, %v945
        %vm947 = vweird.f32 %v742
        %vm948 = vweird.f32 %v942
        %vm949 = vmor %vm947, %vm948
        %v950 = vsel %vm949, %v942, %v946
        %v951 = vand.u32 2147483647, %v742
        %vm952 = vcmp.eq.f32.partialorder %v951, 8.507059e+37
        %v953 = vand.u32 %v742, 2147483648
        %v954 = vor.u32 1.1754944e-38, %v953
        %v955 = vsel %vm952, %v954, %v950
        %v956 = vmul.f32 1.0, %v955
        %v957 = vrcp.pop %v743
        %v958 = vmul.f32 %v743, %v957
        %v959 = vsub.f32 1.0, %v958
        %v960 = vmul.f32 %v957, %v959
        %v961 = vadd.f32 %v957, %v960
        %vm962 = vweird.f32 %v743
        %vm963 = vweird.f32 %v957
        %vm964 = vmor %vm962, %vm963
        %v965 = vsel %vm964, %v957, %v961
        %v966 = vand.u32 2147483647, %v743
        %vm967 = vcmp.eq.f32.partialorder %v966, 8.507059e+37
        %v968 = vand.u32 %v743, 2147483648
        %v969 = vor.u32 1.1754944e-38, %v968
        %v970 = vsel %vm967, %v969, %v965
        %v971 = vmul.f32 1.0, %v970
        %v972 = vrcp.pop %v744
        %v973 = vmul.f32 %v744, %v972
        %v974 = vsub.f32 1.0, %v973
        %v975 = vmul.f32 %v972, %v974
        %v976 = vadd.f32 %v972, %v975
        %vm977 = vweird.f32 %v744
        %vm978 = vweird.f32 %v972
        %vm979 = vmor %vm977, %vm978
        %v980 = vsel %vm979, %v972, %v976
        %v981 = vand.u32 2147483647, %v744
        %vm982 = vcmp.eq.f32.partialorder %v981, 8.507059e+37
        %v983 = vand.u32 %v744, 2147483648
        %v984 = vor.u32 1.1754944e-38, %v983
        %v985 = vsel %vm982, %v984, %v980
        %v986 = vmul.f32 1.0, %v985
        %v987 = vrcp.pop %v745
        %v988 = vmul.f32 %v745, %v987
        %v989 = vsub.f32 1.0, %v988
        %v990 = vmul.f32 %v987, %v989
        %v991 = vadd.f32 %v987, %v990
        %vm992 = vweird.f32 %v745
        %vm993 = vweird.f32 %v987
        %vm994 = vmor %vm992, %vm993
        %v995 = vsel %vm994, %v987, %v991
        %v996 = vand.u32 2147483647, %v745
        %vm997 = vcmp.eq.f32.partialorder %v996, 8.507059e+37
        %v998 = vand.u32 %v745, 2147483648
        %v999 = vor.u32 1.1754944e-38, %v998
        %v1000 = vsel %vm997, %v999, %v995
        %v1001 = vmul.f32 1.0, %v1000
        %v1002 = vrcp.pop %v746
        %v1003 = vmul.f32 %v746, %v1002
        %v1004 = vsub.f32 1.0, %v1003
        %v1005 = vmul.f32 %v1002, %v1004
        %v1006 = vadd.f32 %v1002, %v1005
        %vm1007 = vweird.f32 %v746
        %vm1008 = vweird.f32 %v1002
        %vm1009 = vmor %vm1007, %vm1008
        %v1010 = vsel %vm1009, %v1002, %v1006
        %v1011 = vand.u32 2147483647, %v746
        %vm1012 = vcmp.eq.f32.partialorder %v1011, 8.507059e+37
        %v1013 = vand.u32 %v746, 2147483648
        %v1014 = vor.u32 1.1754944e-38, %v1013
        %v1015 = vsel %vm1012, %v1014, %v1010
        %v1016 = vmul.f32 1.0, %v1015
        %v1017 = vrcp.pop %v747
        %v1018 = vmul.f32 %v747, %v1017
        %v1019 = vsub.f32 1.0, %v1018
        %v1020 = vmul.f32 %v1017, %v1019
        %v1021 = vadd.f32 %v1017, %v1020
        %vm1022 = vweird.f32 %v747
        %vm1023 = vweird.f32 %v1017
        %vm1024 = vmor %vm1022, %vm1023
        %v1025 = vsel %vm1024, %v1017, %v1021
        %v1026 = vand.u32 2147483647, %v747
        %vm1027 = vcmp.eq.f32.partialorder %v1026, 8.507059e+37
        %v1028 = vand.u32 %v747, 2147483648
        %v1029 = vor.u32 1.1754944e-38, %v1028
        %v1030 = vsel %vm1027, %v1029, %v1025
        %v1031 = vmul.f32 1.0, %v1030
        %v1032 = vrcp.pop %v748
        %v1033 = vmul.f32 %v748, %v1032
        %v1034 = vsub.f32 1.0, %v1033
        %v1035 = vmul.f32 %v1032, %v1034
        %v1036 = vadd.f32 %v1032, %v1035
        %vm1037 = vweird.f32 %v748
        %vm1038 = vweird.f32 %v1032
        %vm1039 = vmor %vm1037, %vm1038
        %v1040 = vsel %vm1039, %v1032, %v1036
        %v1041 = vand.u32 2147483647, %v748
        %vm1042 = vcmp.eq.f32.partialorder %v1041, 8.507059e+37
        %v1043 = vand.u32 %v748, 2147483648
        %v1044 = vor.u32 1.1754944e-38, %v1043
        %v1045 = vsel %vm1042, %v1044, %v1040
        %v1046 = vmul.f32 1.0, %v1045
        %v1047 = vrcp.pop %v749
        %v1048 = vmul.f32 %v749, %v1047
        %v1049 = vsub.f32 1.0, %v1048
        %v1050 = vmul.f32 %v1047, %v1049
        %v1051 = vadd.f32 %v1047, %v1050
        %vm1052 = vweird.f32 %v749
        %vm1053 = vweird.f32 %v1047
        %vm1054 = vmor %vm1052, %vm1053
        %v1055 = vsel %vm1054, %v1047, %v1051
        %v1056 = vand.u32 2147483647, %v749
        %vm1057 = vcmp.eq.f32.partialorder %v1056, 8.507059e+37
        %v1058 = vand.u32 %v749, 2147483648
        %v1059 = vor.u32 1.1754944e-38, %v1058
        %v1060 = vsel %vm1057, %v1059, %v1055
        %v1061 = vmul.f32 1.0, %v1060
        %v1062 = vrcp.pop %v750
        %v1063 = vmul.f32 %v750, %v1062
        %v1064 = vsub.f32 1.0, %v1063
        %v1065 = vmul.f32 %v1062, %v1064
        %v1066 = vadd.f32 %v1062, %v1065
        %vm1067 = vweird.f32 %v750
        %vm1068 = vweird.f32 %v1062
        %vm1069 = vmor %vm1067, %vm1068
        %v1070 = vsel %vm1069, %v1062, %v1066
        %v1071 = vand.u32 2147483647, %v750
        %vm1072 = vcmp.eq.f32.partialorder %v1071, 8.507059e+37
        %v1073 = vand.u32 %v750, 2147483648
        %v1074 = vor.u32 1.1754944e-38, %v1073
        %v1075 = vsel %vm1072, %v1074, %v1070
        %v1076 = vmul.f32 1.0, %v1075
        %v1077 = vrcp.pop %v751
        %v1078 = vmul.f32 %v751, %v1077
        %v1079 = vsub.f32 1.0, %v1078
        %v1080 = vmul.f32 %v1077, %v1079
        %v1081 = vadd.f32 %v1077, %v1080
        %vm1082 = vweird.f32 %v751
        %vm1083 = vweird.f32 %v1077
        %vm1084 = vmor %vm1082, %vm1083
        %v1085 = vsel %vm1084, %v1077, %v1081
        %v1086 = vand.u32 2147483647, %v751
        %vm1087 = vcmp.eq.f32.partialorder %v1086, 8.507059e+37
        %v1088 = vand.u32 %v751, 2147483648
        %v1089 = vor.u32 1.1754944e-38, %v1088
        %v1090 = vsel %vm1087, %v1089, %v1085
        %v1091 = vmul.f32 1.0, %v1090
        %v1092 = vrcp.pop %v752
        %v1093 = vmul.f32 %v752, %v1092
        %v1094 = vsub.f32 1.0, %v1093
        %v1095 = vmul.f32 %v1092, %v1094
        %v1096 = vadd.f32 %v1092, %v1095
        %vm1097 = vweird.f32 %v752
        %vm1098 = vweird.f32 %v1092
        %vm1099 = vmor %vm1097, %vm1098
        %v1100 = vsel %vm1099, %v1092, %v1096
        %v1101 = vand.u32 2147483647, %v752
        %vm1102 = vcmp.eq.f32.partialorder %v1101, 8.507059e+37
        %v1103 = vand.u32 %v752, 2147483648
        %v1104 = vor.u32 1.1754944e-38, %v1103
        %v1105 = vsel %vm1102, %v1104, %v1100
        %v1106 = vmul.f32 1.0, %v1105
        %v1107 = vrcp.pop %v753
        %v1108 = vmul.f32 %v753, %v1107
        %v1109 = vsub.f32 1.0, %v1108
        %v1110 = vmul.f32 %v1107, %v1109
        %v1111 = vadd.f32 %v1107, %v1110
        %vm1112 = vweird.f32 %v753
        %vm1113 = vweird.f32 %v1107
        %vm1114 = vmor %vm1112, %vm1113
        %v1115 = vsel %vm1114, %v1107, %v1111
        %v1116 = vand.u32 2147483647, %v753
        %vm1117 = vcmp.eq.f32.partialorder %v1116, 8.507059e+37
        %v1118 = vand.u32 %v753, 2147483648
        %v1119 = vor.u32 1.1754944e-38, %v1118
        %v1120 = vsel %vm1117, %v1119, %v1115
        %v1121 = vmul.f32 1.0, %v1120
        %v1122 = vrcp.pop %v754
        %v1123 = vmul.f32 %v754, %v1122
        %v1124 = vsub.f32 1.0, %v1123
        %v1125 = vmul.f32 %v1122, %v1124
        %v1126 = vadd.f32 %v1122, %v1125
        %vm1127 = vweird.f32 %v754
        %vm1128 = vweird.f32 %v1122
        %vm1129 = vmor %vm1127, %vm1128
        %v1130 = vsel %vm1129, %v1122, %v1126
        %v1131 = vand.u32 2147483647, %v754
        %vm1132 = vcmp.eq.f32.partialorder %v1131, 8.507059e+37
        %v1133 = vand.u32 %v754, 2147483648
        %v1134 = vor.u32 1.1754944e-38, %v1133
        %v1135 = vsel %vm1132, %v1134, %v1130
        %v1136 = vmul.f32 1.0, %v1135
        %v1137 = vrcp.pop %v755
        %v1138 = vmul.f32 %v755, %v1137
        %v1139 = vsub.f32 1.0, %v1138
        %v1140 = vmul.f32 %v1137, %v1139
        %v1141 = vadd.f32 %v1137, %v1140
        %vm1142 = vweird.f32 %v755
        %vm1143 = vweird.f32 %v1137
        %vm1144 = vmor %vm1142, %vm1143
        %v1145 = vsel %vm1144, %v1137, %v1141
        %v1146 = vand.u32 2147483647, %v755
        %vm1147 = vcmp.eq.f32.partialorder %v1146, 8.507059e+37
        %v1148 = vand.u32 %v755, 2147483648
        %v1149 = vor.u32 1.1754944e-38, %v1148
        %v1150 = vsel %vm1147, %v1149, %v1145
        %v1151 = vmul.f32 1.0, %v1150
        %v1152 = vrcp.pop %v756
        %v1153 = vmul.f32 %v756, %v1152
        %v1154 = vsub.f32 1.0, %v1153
        %v1155 = vmul.f32 %v1152, %v1154
        %v1156 = vadd.f32 %v1152, %v1155
        %vm1157 = vweird.f32 %v756
        %vm1158 = vweird.f32 %v1152
        %vm1159 = vmor %vm1157, %vm1158
        %v1160 = vsel %vm1159, %v1152, %v1156
        %v1161 = vand.u32 2147483647, %v756
        %vm1162 = vcmp.eq.f32.partialorder %v1161, 8.507059e+37
        %v1163 = vand.u32 %v756, 2147483648
        %v1164 = vor.u32 1.1754944e-38, %v1163
        %v1165 = vsel %vm1162, %v1164, %v1160
        %v1166 = vmul.f32 1.0, %v1165
        %v1167 = vrcp.pop %v757
        %v1168 = vmul.f32 %v757, %v1167
        %v1169 = vsub.f32 1.0, %v1168
        %v1170 = vmul.f32 %v1167, %v1169
        %v1171 = vadd.f32 %v1167, %v1170
        %vm1172 = vweird.f32 %v757
        %vm1173 = vweird.f32 %v1167
        %vm1174 = vmor %vm1172, %vm1173
        %v1175 = vsel %vm1174, %v1167, %v1171
        %v1176 = vand.u32 2147483647, %v757
        %vm1177 = vcmp.eq.f32.partialorder %v1176, 8.507059e+37
        %v1178 = vand.u32 %v757, 2147483648
        %v1179 = vor.u32 1.1754944e-38, %v1178
        %v1180 = vsel %vm1177, %v1179, %v1175
        %v1181 = vmul.f32 1.0, %v1180
        %v1182 = vrcp.pop %v758
        %v1183 = vmul.f32 %v758, %v1182
        %v1184 = vsub.f32 1.0, %v1183
        %v1185 = vmul.f32 %v1182, %v1184
        %v1186 = vadd.f32 %v1182, %v1185
        %vm1187 = vweird.f32 %v758
        %vm1188 = vweird.f32 %v1182
        %vm1189 = vmor %vm1187, %vm1188
        %v1190 = vsel %vm1189, %v1182, %v1186
        %v1191 = vand.u32 2147483647, %v758
        %vm1192 = vcmp.eq.f32.partialorder %v1191, 8.507059e+37
        %v1193 = vand.u32 %v758, 2147483648
        %v1194 = vor.u32 1.1754944e-38, %v1193
        %v1195 = vsel %vm1192, %v1194, %v1190
        %v1196 = vmul.f32 1.0, %v1195
        %v1197 = vrcp.pop %v759
        %v1198 = vmul.f32 %v759, %v1197
        %v1199 = vsub.f32 1.0, %v1198
        %v1200 = vmul.f32 %v1197, %v1199
        %v1201 = vadd.f32 %v1197, %v1200
        %vm1202 = vweird.f32 %v759
        %vm1203 = vweird.f32 %v1197
        %vm1204 = vmor %vm1202, %vm1203
        %v1205 = vsel %vm1204, %v1197, %v1201
        %v1206 = vand.u32 2147483647, %v759
        %vm1207 = vcmp.eq.f32.partialorder %v1206, 8.507059e+37
        %v1208 = vand.u32 %v759, 2147483648
        %v1209 = vor.u32 1.1754944e-38, %v1208
        %v1210 = vsel %vm1207, %v1209, %v1205
        %v1211 = vmul.f32 1.0, %v1210
        %v1212 = vrcp.pop %v760
        %v1213 = vmul.f32 %v760, %v1212
        %v1214 = vsub.f32 1.0, %v1213
        %v1215 = vmul.f32 %v1212, %v1214
        %v1216 = vadd.f32 %v1212, %v1215
        %vm1217 = vweird.f32 %v760
        %vm1218 = vweird.f32 %v1212
        %vm1219 = vmor %vm1217, %vm1218
        %v1220 = vsel %vm1219, %v1212, %v1216
        %v1221 = vand.u32 2147483647, %v760
        %vm1222 = vcmp.eq.f32.partialorder %v1221, 8.507059e+37
        %v1223 = vand.u32 %v760, 2147483648
        %v1224 = vor.u32 1.1754944e-38, %v1223
        %v1225 = vsel %vm1222, %v1224, %v1220
        %v1226 = vmul.f32 1.0, %v1225
        %v1227 = vrcp.pop %v761
        %v1228 = vmul.f32 %v761, %v1227
        %v1229 = vsub.f32 1.0, %v1228
        %v1230 = vmul.f32 %v1227, %v1229
        %v1231 = vadd.f32 %v1227, %v1230
        %vm1232 = vweird.f32 %v761
        %vm1233 = vweird.f32 %v1227
        %vm1234 = vmor %vm1232, %vm1233
        %v1235 = vsel %vm1234, %v1227, %v1231
        %v1236 = vand.u32 2147483647, %v761
        %vm1237 = vcmp.eq.f32.partialorder %v1236, 8.507059e+37
        %v1238 = vand.u32 %v761, 2147483648
        %v1239 = vor.u32 1.1754944e-38, %v1238
        %v1240 = vsel %vm1237, %v1239, %v1235
        %v1241 = vmul.f32 1.0, %v1240
        %v1242 = vmul.f32 %v602, %v776
        %v1243 = vmul.f32 %v603, %v791
        %v1244 = vmul.f32 %v604, %v806
        %v1245 = vmul.f32 %v605, %v821
        %v1246 = vmul.f32 %v606, %v836
        %v1247 = vmul.f32 %v607, %v851
        %v1248 = vmul.f32 %v608, %v866
        %v1249 = vmul.f32 %v609, %v881
        %v1250 = vmul.f32 %v610, %v896
        %v1251 = vmul.f32 %v611, %v911
        %v1252 = vmul.f32 %v612, %v926
        %v1253 = vmul.f32 %v613, %v941
        %v1254 = vmul.f32 %v614, %v956
        %v1255 = vmul.f32 %v615, %v971
        %v1256 = vmul.f32 %v616, %v986
        %v1257 = vmul.f32 %v617, %v1001
        %v1258 = vmul.f32 %v618, %v1016
        %v1259 = vmul.f32 %v619, %v1031
        %v1260 = vmul.f32 %v620, %v1046
        %v1261 = vmul.f32 %v621, %v1061
        %v1262 = vmul.f32 %v622, %v1076
        %v1263 = vmul.f32 %v623, %v1091
        %v1264 = vmul.f32 %v624, %v1106
        %v1265 = vmul.f32 %v625, %v1121
        %v1266 = vmul.f32 %v626, %v1136
        %v1267 = vmul.f32 %v627, %v1151
        %v1268 = vmul.f32 %v628, %v1166
        %v1269 = vmul.f32 %v629, %v1181
        %v1270 = vmul.f32 %v630, %v1196
        %v1271 = vmul.f32 %v631, %v1211
        %v1272 = vmul.f32 %v632, %v1226
        %v1273 = vmul.f32 %v633, %v1241
        %vm1274 = vcmask 64512
        %1275 = vst.msk [vmem:[%s309] sm:$0xff] %vm1274, %v1242
        %1276 = vst.msk [vmem:[%s309 + $0x8] sm:$0xff] %vm1274, %v1243
        %1277 = vst.msk [vmem:[%s309 + $0x10] sm:$0xff] %vm1274, %v1244
        %1278 = vst.msk [vmem:[%s309 + $0x18] sm:$0xff] %vm1274, %v1245
        %1279 = vst.msk [vmem:[%s309 + $0x20] sm:$0xff] %vm1274, %v1246
        %1280 = vst.msk [vmem:[%s309 + $0x28] sm:$0xff] %vm1274, %v1247
        %1281 = vst.msk [vmem:[%s309 + $0x30] sm:$0xff] %vm1274, %v1248
        %1282 = vst.msk [vmem:[%s309 + $0x38] sm:$0xff] %vm1274, %v1249
        %1283 = vst.msk [vmem:[%s309 + $0x40] sm:$0xff] %vm1274, %v1250
        %1284 = vst.msk [vmem:[%s309 + $0x48] sm:$0xff] %vm1274, %v1251
        %1285 = vst.msk [vmem:[%s309 + $0x50] sm:$0xff] %vm1274, %v1252
        %1286 = vst.msk [vmem:[%s309 + $0x58] sm:$0xff] %vm1274, %v1253
        %1287 = vst.msk [vmem:[%s309 + $0x60] sm:$0xff] %vm1274, %v1254
        %1288 = vst.msk [vmem:[%s309 + $0x68] sm:$0xff] %vm1274, %v1255
        %1289 = vst.msk [vmem:[%s309 + $0x70] sm:$0xff] %vm1274, %v1256
        %1290 = vst.msk [vmem:[%s309 + $0x78] sm:$0xff] %vm1274, %v1257
        %1291 = vst.msk [vmem:[%s309 + $0x80] sm:$0xff] %vm1274, %v1258
        %1292 = vst.msk [vmem:[%s309 + $0x88] sm:$0xff] %vm1274, %v1259
        %1293 = vst.msk [vmem:[%s309 + $0x90] sm:$0xff] %vm1274, %v1260
        %1294 = vst.msk [vmem:[%s309 + $0x98] sm:$0xff] %vm1274, %v1261
        %1295 = vst.msk [vmem:[%s309 + $0xa0] sm:$0xff] %vm1274, %v1262
        %1296 = vst.msk [vmem:[%s309 + $0xa8] sm:$0xff] %vm1274, %v1263
        %1297 = vst.msk [vmem:[%s309 + $0xb0] sm:$0xff] %vm1274, %v1264
        %1298 = vst.msk [vmem:[%s309 + $0xb8] sm:$0xff] %vm1274, %v1265
        %1299 = vst.msk [vmem:[%s309 + $0xc0] sm:$0xff] %vm1274, %v1266
        %1300 = vst.msk [vmem:[%s309 + $0xc8] sm:$0xff] %vm1274, %v1267
        %1301 = vst.msk [vmem:[%s309 + $0xd0] sm:$0xff] %vm1274, %v1268
        %1302 = vst.msk [vmem:[%s309 + $0xd8] sm:$0xff] %vm1274, %v1269
        %1303 = vst.msk [vmem:[%s309 + $0xe0] sm:$0xff] %vm1274, %v1270
        %1304 = vst.msk [vmem:[%s309 + $0xe8] sm:$0xff] %vm1274, %v1271
        %1305 = vst.msk [vmem:[%s309 + $0xf0] sm:$0xff] %vm1274, %v1272
        %1306 = vst.msk [vmem:[%s309 + $0xf8] sm:$0xff] %vm1274, %v1273
        %s1307 = smul.u32 16, %s24
        %p1308 = scmp.lt.s32.totalorder %s23, 1
        %s1309 = scalar_select %p1308, %s23, 1
        %p1310 = scmp.lt.s32.totalorder %s1307, 15
        %s1311 = scalar_select %p1310, %s1307, 15
        %p1312 = scmp.lt.s32.totalorder %s25, 0
        %s1313 = scalar_select %p1312, %s25, 0
        %s1314 = smul.addr %s1311, 2
        %s1315 = sadd.s32 %s1313, %s1314
        %s1316 = smul.addr %s1309, 32
        %s1317 = sadd.s32 %s1315, %s1316
        %s1318 = smul.addr %s1317, 8
        %s1319 = scalar_lea.vmem %s4, %s1318
        // Predicated region
        $region41: #{tpu_custom_call.1} parent=35 // pred_check
          %p1320 = pneg %p165
        $region42: #{tpu_custom_call.1} parent=35 // pred_check_branch
          %1322 = sbr.rel (%p1320) target = $region44
        $region43: #{tpu_custom_call.1} parent=35 // pred_region
          %s1323 = smul.u32 16, %s24
        $region44: #{tpu_custom_call.1} parent=35 // pred_fallthru
          _
      $region36: #{tpu_custom_call.1} parent=5 // pred_fallthru
        _
      %p1324 = scmp.le.s32.totalorder 2, %s13
      // Predicated region
      $region45: #{tpu_custom_call.1} parent=5 // pred_check
        %p1325 = pneg %p1324
      $region46: #{tpu_custom_call.1} parent=5 // pred_check_branch
        %1327 = sbr.rel (%p1325) target = $region48
      $region47: #{tpu_custom_call.1} parent=5 // pred_region
        %s1328 = ssub.s32 %s13, 2
        // Predicated region
        $region49: #{tpu_custom_call.1} parent=47 // pred_check
          %p1329 = pneg %p171
        $region50: #{tpu_custom_call.1} parent=47 // pred_check_branch
          %1331 = sbr.rel (%p1329) target = $region52
        $region51: #{tpu_custom_call.1} parent=47 // pred_region
          %s1332 = smul.u32 16, %s27
          %p1333 = scmp.lt.s32.totalorder %s26, 1
          %s1334 = scalar_select %p1333, %s26, 1
          %p1335 = scmp.lt.s32.totalorder %s1332, 15
          %s1336 = scalar_select %p1335, %s1332, 15
          %p1337 = scmp.lt.s32.totalorder %s28, 0
          %s1338 = scalar_select %p1337, %s28, 0
          %s1339 = smul.addr %s1336, 2
          %s1340 = sadd.s32 %s1338, %s1339
          %s1341 = smul.addr %s1334, 32
          %s1342 = sadd.s32 %s1340, %s1341
          %s1343 = smul.addr %s1342, 8
          %s1344 = scalar_lea.vmem %s4, %s1343
        $region52: #{tpu_custom_call.1} parent=47 // pred_fallthru
          _
      $region48: #{tpu_custom_call.1} parent=5 // pred_fallthru
        _
    $region6: #{tpu_custom_call.1} parent=1 // loop_footer
      %s17 = sadd.s32 1, %s13
    $region7: #{tpu_custom_call.1} parent=1 // loop_footer_branch
      %12 = sbr.rel target = $region3
    $region8: #{tpu_custom_call.1} parent=1 // loop_exit
      _
    %1345 = vsyncpa [#allocation3], 1
    %s1346 = scalar_lea.sflag [#allocation3], 1
    %1347 = vsyncpa %s1346, 1

</llo_original>
